<compile_context>
chip_gen: v5e
topology: v5e:2x2
jax: 0.10.0
libtpu: 0.0.40
codegen_flags: <defaults>
</compile_context>

<pallas_src>
import functools

import jax
import jax.numpy as jnp
import numpy as np
from jax.experimental import pallas as pl
from jax.experimental.pallas import tpu as pltpu


_NUM_CH = 30          # B*5 + 20 with B == 2
_LANES = 128
_MAX_TILE_R = 128     # 128*128 = 16384 cells/tile -> ~1.9 MiB per input block


def _round_up(x, m):
    return ((x + m - 1) // m) * m


def _loss_kernel(p_ref, t_ref, out_ref, *, l_coord, l_noobj):
    """p_ref, t_ref: (30, TILE_R, 128) blocks; out_ref: (1, 1, 128) partial sums."""
    f32 = jnp.float32

    def P(i):                       # channel i of the predictions, (TILE_R, 128)
        return p_ref[i].astype(f32)

    def T(i):                       # channel i of the targets, (TILE_R, 128)
        return t_ref[i].astype(f32)

    t_conf = T(4)
    coo = t_conf > 0.0              # cells that contain an object
    noo = t_conf == 0.0             # empty cells (and zero-padded cells)

    # ---- no-object confidence term (channels 4 and 9) -----------------------
    d4 = P(4) - t_conf
    d9 = P(9) - T(9)
    noo_sq = d4 * d4 + d9 * d9

    # ---- class term (channels 10:30) ----------------------------------------
    class_sq = jnp.zeros_like(t_conf)
    for c in range(10, 30):
        d = P(c) - T(c)
        class_sq = class_sq + d * d

    # ---- responsible-box selection via IoU (B = 2 boxes per cell) -----------
    inv14 = 1.0 / 14.0

    def to_xyxy(x, y, w, h):
        cx = x * inv14
        cy = y * inv14
        hw = 0.5 * w
        hh = 0.5 * h
        return cx - hw, cy - hh, cx + hw, cy + hh

    p0x, p0y, p0w, p0h = P(0), P(1), P(2), P(3)
    p1x, p1y, p1w, p1h = P(5), P(6), P(7), P(8)
    t0x, t0y, t0w, t0h = T(0), T(1), T(2), T(3)

    b_p0 = to_xyxy(p0x, p0y, p0w, p0h)
    b_p1 = to_xyxy(p1x, p1y, p1w, p1h)
    b_t0 = to_xyxy(t0x, t0y, t0w, t0h)   # first target box of the cell

    def iou(a, b):
        lx = jnp.maximum(a[0], b[0])
        ly = jnp.maximum(a[1], b[1])
        rx = jnp.minimum(a[2], b[2])
        ry = jnp.minimum(a[3], b[3])
        iw = jnp.maximum(rx - lx, 0.0)
        ih = jnp.maximum(ry - ly, 0.0)
        inter = iw * ih
        a1 = (a[2] - a[0]) * (a[3] - a[1])
        a2 = (b[2] - b[0]) * (b[3] - b[1])
        union = a1 + a2 - inter + 1e-10  # eps: no 0/0 for empty / padded cells
        return inter / union             # exact divide; EUP has plenty of slack

    iou0 = iou(b_p0, b_t0)
    iou1 = iou(b_p1, b_t0)
    resp1 = iou1 > iou0                  # True -> predicted box 1 is responsible
    max_iou = jnp.maximum(iou0, iou1)

    def sel(a1_, a0_):
        return jnp.where(resp1, a1_, a0_)

    pr_x, pr_y = sel(p1x, p0x), sel(p1y, p0y)
    pr_w, pr_h = sel(p1w, p0w), sel(p1h, p0h)
    pr_c = sel(P(9), P(4))               # responsible predicted confidence
    pnr_c = sel(P(4), P(9))              # not-responsible predicted confidence
    tr_x, tr_y = sel(T(5), t0x), sel(T(6), t0y)
    tr_w, tr_h = sel(T(7), t0w), sel(T(8), t0h)

    # ---- localisation / contain / not-contain -------------------------------
    dx = pr_x - tr_x
    dy = pr_y - tr_y
    # clamp before sqrt so empty cells stay finite (they are selected away)
    dw = jnp.sqrt(jnp.maximum(pr_w, 0.0)) - jnp.sqrt(jnp.maximum(tr_w, 0.0))
    dh = jnp.sqrt(jnp.maximum(pr_h, 0.0)) - jnp.sqrt(jnp.maximum(tr_h, 0.0))
    loc_sq = dx * dx + dy * dy + dw * dw + dh * dh

    dct = pr_c - max_iou
    contain_sq = dct * dct
    not_contain_sq = pnr_c * pnr_c

    # ---- fused per-cell contribution (two selects, no wide channel masks) ---
    coo_term = l_coord * loc_sq + 2.0 * contain_sq + not_contain_sq + class_sq
    noo_term = l_noobj * noo_sq
    contrib = jnp.where(coo, coo_term, jnp.where(noo, noo_term, 0.0))

    # sublane reduce only; the tiny cross-lane / cross-tile reduce is done by
    # the wrapper so each grid step owns its own lane-dense output block.
    partial = jnp.sum(contrib, axis=0, keepdims=True)          # (1, 128)
    out_ref[...] = partial.reshape(1, 1, _LANES)


@functools.partial(jax.jit, static_argnames=("S", "B", "l_coord", "l_noobj"))
def yolo_loss_pallas(pred, target, *, S, B, l_coord, l_noobj):
    """pred, target: (N, S, S, B*5+20) channel-last arrays (like the PyTorch module)."""
    assert B == 2 and pred.shape[-1] == B * 5 + 20 == _NUM_CH
    n_batch = pred.shape[0]
    C = n_batch * S * S

    rows = _round_up(max(pl.cdiv(C, _LANES), 1), 8)
    tile_r = min(_MAX_TILE_R, rows)
    rows_pad = _round_up(rows, tile_r)
    c_pad = rows_pad * _LANES

    p2 = pred.reshape(C, _NUM_CH)
    t2 = target.reshape(C, _NUM_CH)
    if c_pad != C:
        # zero-pad BOTH arrays: padded cells have t_conf == 0 and contribute 0.
        pad = ((0, c_pad - C), (0, 0))
        p2 = jnp.pad(p2, pad)
        t2 = jnp.pad(t2, pad)

    # Channel-major, then split the cell axis into (rows, 128) so each channel
    # is a dense (tile_r, 128) slab inside the kernel (full 8x128 vreg use).
    # Input dtype is preserved (bf16 would stream at half the HBM bytes); the
    # f32 cast happens inside the kernel.
    # TODO(synk): this transpose is still one wrapper-side XLA pass per input;
    # Mosaic has no robust in-kernel (cells, 30) -> (30, cells) transpose.
    p = p2.T.reshape(_NUM_CH, rows_pad, _LANES)
    t = t2.T.reshape(_NUM_CH, rows_pad, _LANES)

    grid_n = rows_pad // tile_r
    kernel = functools.partial(_loss_kernel, l_coord=float(l_coord),
                               l_noobj=float(l_noobj))
    partials = pl.pallas_call(
        kernel,
        out_shape=jax.ShapeDtypeStruct((grid_n, 1, _LANES), jnp.float32),
        grid=(grid_n,),
        in_specs=[pl.BlockSpec((_NUM_CH, tile_r, _LANES), lambda i: (0, i, 0)),
                  pl.BlockSpec((_NUM_CH, tile_r, _LANES), lambda i: (0, i, 0))],
        out_specs=pl.BlockSpec((1, 1, _LANES), lambda i: (i, 0, 0)),
        compiler_params=pltpu.CompilerParams(
            dimension_semantics=("parallel",)),   # megacore-shardable on v7x
    )(p, t)

    return jnp.sum(partials) / n_batch


def yolo_loss_reference(pred, target, *, S, B, l_coord, l_noobj):
    """Pure-JAX reference (same dense reformulation of the PyTorch loss)."""
    n_batch = pred.shape[0]
    P = pred.reshape(-1, _NUM_CH).astype(jnp.float32)
    T = target.reshape(-1, _NUM_CH).astype(jnp.float32)

    t_conf = T[:, 4]
    coo = t_conf > 0.0
    noo = t_conf == 0.0

    noo_sq = (P[:, 4] - T[:, 4]) ** 2 + (P[:, 9] - T[:, 9]) ** 2
    class_sq = jnp.sum((P[:, 10:] - T[:, 10:]) ** 2, axis=1)

    def to_xyxy(x, y, w, h):
        cx = x / 14.0
        cy = y / 14.0
        return cx - 0.5 * w, cy - 0.5 * h, cx + 0.5 * w, cy + 0.5 * h

    b_p0 = to_xyxy(P[:, 0], P[:, 1], P[:, 2], P[:, 3])
    b_p1 = to_xyxy(P[:, 5], P[:, 6], P[:, 7], P[:, 8])
    b_t0 = to_xyxy(T[:, 0], T[:, 1], T[:, 2], T[:, 3])

    def iou(a, b):
        lx, ly = jnp.maximum(a[0], b[0]), jnp.maximum(a[1], b[1])
        rx, ry = jnp.minimum(a[2], b[2]), jnp.minimum(a[3], b[3])
        inter = jnp.maximum(rx - lx, 0.0) * jnp.maximum(ry - ly, 0.0)
        a1 = (a[2] - a[0]) * (a[3] - a[1])
        a2 = (b[2] - b[0]) * (b[3] - b[1])
        return inter / (a1 + a2 - inter + 1e-10)

    iou0, iou1 = iou(b_p0, b_t0), iou(b_p1, b_t0)
    resp1 = iou1 > iou0
    max_iou = jnp.maximum(iou0, iou1)

    def sel(a1_, a0_):
        return jnp.where(resp1, a1_, a0_)

    pr_x, pr_y = sel(P[:, 5], P[:, 0]), sel(P[:, 6], P[:, 1])
    pr_w, pr_h = sel(P[:, 7], P[:, 2]), sel(P[:, 8], P[:, 3])
    pr_c = sel(P[:, 9], P[:, 4])
    pnr_c = sel(P[:, 4], P[:, 9])
    tr_x, tr_y = sel(T[:, 5], T[:, 0]), sel(T[:, 6], T[:, 1])
    tr_w, tr_h = sel(T[:, 7], T[:, 2]), sel(T[:, 8], T[:, 3])

    dx, dy = pr_x - tr_x, pr_y - tr_y
    dw = jnp.sqrt(jnp.maximum(pr_w, 0.0)) - jnp.sqrt(jnp.maximum(tr_w, 0.0))
    dh = jnp.sqrt(jnp.maximum(pr_h, 0.0)) - jnp.sqrt(jnp.maximum(tr_h, 0.0))
    loc_sq = dx * dx + dy * dy + dw * dw + dh * dh

    contain_sq = (pr_c - max_iou) ** 2
    not_contain_sq = pnr_c ** 2

    coo_term = (float(l_coord) * loc_sq + 2.0 * contain_sq + not_contain_sq
                + class_sq)
    noo_term = float(l_noobj) * noo_sq
    contrib = jnp.where(coo, coo_term, jnp.where(noo, noo_term, 0.0))
    return jnp.sum(contrib) / n_batch


if __name__ == "__main__":
    S, B = 7, 2
    l_coord, l_noobj = 5.0, 0.5
    N = 2

    key = jax.random.PRNGKey(0)
    k1, k2, k3 = jax.random.split(key, 3)

    # predictions: strictly positive w/h so sqrt() is well defined (same
    # implicit assumption as the PyTorch reference).
    pred = jax.random.uniform(k1, (N, S, S, 30), minval=0.05, maxval=0.95,
                              dtype=jnp.float32)

    # targets: ~30% of cells contain an object; no-object cells are all zero.
    obj = jax.random.bernoulli(k2, 0.3, (N, S, S)).astype(jnp.float32)
    tvals = jax.random.uniform(k3, (N, S, S, 30), minval=0.05, maxval=0.95,
                               dtype=jnp.float32)
    target = tvals * obj[..., None]
    target = target.at[..., 4].set(obj)   # confidence channels
    target = target.at[..., 9].set(obj)

    loss = yolo_loss_pallas(pred, target, S=S, B=B,
                            l_coord=l_coord, l_noobj=l_noobj)
    loss = jax.block_until_ready(loss)

    ref = yolo_loss_reference(pred, target, S=S, B=B,
                              l_coord=l_coord, l_noobj=l_noobj)
    ref = jax.block_until_ready(ref)

    np.testing.assert_allclose(np.asarray(loss), np.asarray(ref),
                               rtol=1e-4, atol=1e-4)
    print("KERNEL_OK")
</pallas_src>

<mosaic_0001>
module attributes {stable_mosaic.version = 11 : i64} {
  func.func @_loss_kernel(%arg0: i32, %arg1: memref<30x8x128xf32, #tpu.memory_space<vmem>>, %arg2: memref<30x8x128xf32, #tpu.memory_space<vmem>>, %arg3: memref<1x1x128xf32, #tpu.memory_space<vmem>>) attributes {dimension_semantics = [#tpu.dimension_semantics<parallel>], iteration_bounds = array<i64: 1>, scalar_prefetch = 0 : i64, scratch_operands = 0 : i64, tpu.core_type = #tpu.core_type<tc>, window_params = [{transform_indices = @transform_0, window_bounds = array<i64: 30, 8, 128>}, {transform_indices = @transform_1, window_bounds = array<i64: 30, 8, 128>}, {transform_indices = @transform_2, window_bounds = array<i64: 1, 1, 128>}]} {
    %c4 = arith.constant 4 : index
    %c0 = arith.constant 0 : index
    %c0_0 = arith.constant 0 : index
    %0 = vector.load %arg2[%c4, %c0, %c0_0] : memref<30x8x128xf32, #tpu.memory_space<vmem>>, vector<1x8x128xf32>
    %1 = vector.shape_cast %0 : vector<1x8x128xf32> to vector<8x128xf32>
    %cst = arith.constant 0.000000e+00 : f32
    %2 = vector.broadcast %cst : f32 to vector<8x128xf32>
    %3 = arith.cmpf ogt, %1, %2 : vector<8x128xf32>
    %cst_1 = arith.constant 0.000000e+00 : f32
    %4 = vector.broadcast %cst_1 : f32 to vector<8x128xf32>
    %5 = arith.cmpf oeq, %1, %4 : vector<8x128xf32>
    %c4_2 = arith.constant 4 : index
    %c0_3 = arith.constant 0 : index
    %c0_4 = arith.constant 0 : index
    %6 = vector.load %arg1[%c4_2, %c0_3, %c0_4] : memref<30x8x128xf32, #tpu.memory_space<vmem>>, vector<1x8x128xf32>
    %7 = vector.shape_cast %6 : vector<1x8x128xf32> to vector<8x128xf32>
    %8 = arith.subf %7, %1 : vector<8x128xf32>
    %c9 = arith.constant 9 : index
    %c0_5 = arith.constant 0 : index
    %c0_6 = arith.constant 0 : index
    %9 = vector.load %arg1[%c9, %c0_5, %c0_6] : memref<30x8x128xf32, #tpu.memory_space<vmem>>, vector<1x8x128xf32>
    %10 = vector.shape_cast %9 : vector<1x8x128xf32> to vector<8x128xf32>
    %c9_7 = arith.constant 9 : index
    %c0_8 = arith.constant 0 : index
    %c0_9 = arith.constant 0 : index
    %11 = vector.load %arg2[%c9_7, %c0_8, %c0_9] : memref<30x8x128xf32, #tpu.memory_space<vmem>>, vector<1x8x128xf32>
    %12 = vector.shape_cast %11 : vector<1x8x128xf32> to vector<8x128xf32>
    %13 = arith.subf %10, %12 : vector<8x128xf32>
    %14 = arith.mulf %8, %8 : vector<8x128xf32>
    %15 = arith.mulf %13, %13 : vector<8x128xf32>
    %16 = arith.addf %14, %15 : vector<8x128xf32>
    %cst_10 = arith.constant 0.000000e+00 : f32
    %17 = vector.broadcast %cst_10 : f32 to vector<8x128xf32>
    %c10 = arith.constant 10 : index
    %c0_11 = arith.constant 0 : index
    %c0_12 = arith.constant 0 : index
    %18 = vector.load %arg1[%c10, %c0_11, %c0_12] : memref<30x8x128xf32, #tpu.memory_space<vmem>>, vector<1x8x128xf32>
    %19 = vector.shape_cast %18 : vector<1x8x128xf32> to vector<8x128xf32>
    %c10_13 = arith.constant 10 : index
    %c0_14 = arith.constant 0 : index
    %c0_15 = arith.constant 0 : index
    %20 = vector.load %arg2[%c10_13, %c0_14, %c0_15] : memref<30x8x128xf32, #tpu.memory_space<vmem>>, vector<1x8x128xf32>
    %21 = vector.shape_cast %20 : vector<1x8x128xf32> to vector<8x128xf32>
    %22 = arith.subf %19, %21 : vector<8x128xf32>
    %23 = arith.mulf %22, %22 : vector<8x128xf32>
    %24 = arith.addf %17, %23 : vector<8x128xf32>
    %c11 = arith.constant 11 : index
    %c0_16 = arith.constant 0 : index
    %c0_17 = arith.constant 0 : index
    %25 = vector.load %arg1[%c11, %c0_16, %c0_17] : memref<30x8x128xf32, #tpu.memory_space<vmem>>, vector<1x8x128xf32>
    %26 = vector.shape_cast %25 : vector<1x8x128xf32> to vector<8x128xf32>
    %c11_18 = arith.constant 11 : index
    %c0_19 = arith.constant 0 : index
    %c0_20 = arith.constant 0 : index
    %27 = vector.load %arg2[%c11_18, %c0_19, %c0_20] : memref<30x8x128xf32, #tpu.memory_space<vmem>>, vector<1x8x128xf32>
    %28 = vector.shape_cast %27 : vector<1x8x128xf32> to vector<8x128xf32>
    %29 = arith.subf %26, %28 : vector<8x128xf32>
    %30 = arith.mulf %29, %29 : vector<8x128xf32>
    %31 = arith.addf %24, %30 : vector<8x128xf32>
    %c12 = arith.constant 12 : index
    %c0_21 = arith.constant 0 : index
    %c0_22 = arith.constant 0 : index
    %32 = vector.load %arg1[%c12, %c0_21, %c0_22] : memref<30x8x128xf32, #tpu.memory_space<vmem>>, vector<1x8x128xf32>
    %33 = vector.shape_cast %32 : vector<1x8x128xf32> to vector<8x128xf32>
    %c12_23 = arith.constant 12 : index
    %c0_24 = arith.constant 0 : index
    %c0_25 = arith.constant 0 : index
    %34 = vector.load %arg2[%c12_23, %c0_24, %c0_25] : memref<30x8x128xf32, #tpu.memory_space<vmem>>, vector<1x8x128xf32>
    %35 = vector.shape_cast %34 : vector<1x8x128xf32> to vector<8x128xf32>
    %36 = arith.subf %33, %35 : vector<8x128xf32>
    %37 = arith.mulf %36, %36 : vector<8x128xf32>
    %38 = arith.addf %31, %37 : vector<8x128xf32>
    %c13 = arith.constant 13 : index
    %c0_26 = arith.constant 0 : index
    %c0_27 = arith.constant 0 : index
    %39 = vector.load %arg1[%c13, %c0_26, %c0_27] : memref<30x8x128xf32, #tpu.memory_space<vmem>>, vector<1x8x128xf32>
    %40 = vector.shape_cast %39 : vector<1x8x128xf32> to vector<8x128xf32>
    %c13_28 = arith.constant 13 : index
    %c0_29 = arith.constant 0 : index
    %c0_30 = arith.constant 0 : index
    %41 = vector.load %arg2[%c13_28, %c0_29, %c0_30] : memref<30x8x128xf32, #tpu.memory_space<vmem>>, vector<1x8x128xf32>
    %42 = vector.shape_cast %41 : vector<1x8x128xf32> to vector<8x128xf32>
    %43 = arith.subf %40, %42 : vector<8x128xf32>
    %44 = arith.mulf %43, %43 : vector<8x128xf32>
    %45 = arith.addf %38, %44 : vector<8x128xf32>
    %c14 = arith.constant 14 : index
    %c0_31 = arith.constant 0 : index
    %c0_32 = arith.constant 0 : index
    %46 = vector.load %arg1[%c14, %c0_31, %c0_32] : memref<30x8x128xf32, #tpu.memory_space<vmem>>, vector<1x8x128xf32>
    %47 = vector.shape_cast %46 : vector<1x8x128xf32> to vector<8x128xf32>
    %c14_33 = arith.constant 14 : index
    %c0_34 = arith.constant 0 : index
    %c0_35 = arith.constant 0 : index
    %48 = vector.load %arg2[%c14_33, %c0_34, %c0_35] : memref<30x8x128xf32, #tpu.memory_space<vmem>>, vector<1x8x128xf32>
    %49 = vector.shape_cast %48 : vector<1x8x128xf32> to vector<8x128xf32>
    %50 = arith.subf %47, %49 : vector<8x128xf32>
    %51 = arith.mulf %50, %50 : vector<8x128xf32>
    %52 = arith.addf %45, %51 : vector<8x128xf32>
    %c15 = arith.constant 15 : index
    %c0_36 = arith.constant 0 : index
    %c0_37 = arith.constant 0 : index
    %53 = vector.load %arg1[%c15, %c0_36, %c0_37] : memref<30x8x128xf32, #tpu.memory_space<vmem>>, vector<1x8x128xf32>
    %54 = vector.shape_cast %53 : vector<1x8x128xf32> to vector<8x128xf32>
    %c15_38 = arith.constant 15 : index
    %c0_39 = arith.constant 0 : index
    %c0_40 = arith.constant 0 : index
    %55 = vector.load %arg2[%c15_38, %c0_39, %c0_40] : memref<30x8x128xf32, #tpu.memory_space<vmem>>, vector<1x8x128xf32>
    %56 = vector.shape_cast %55 : vector<1x8x128xf32> to vector<8x128xf32>
    %57 = arith.subf %54, %56 : vector<8x128xf32>
    %58 = arith.mulf %57, %57 : vector<8x128xf32>
    %59 = arith.addf %52, %58 : vector<8x128xf32>
    %c16 = arith.constant 16 : index
    %c0_41 = arith.constant 0 : index
    %c0_42 = arith.constant 0 : index
    %60 = vector.load %arg1[%c16, %c0_41, %c0_42] : memref<30x8x128xf32, #tpu.memory_space<vmem>>, vector<1x8x128xf32>
    %61 = vector.shape_cast %60 : vector<1x8x128xf32> to vector<8x128xf32>
    %c16_43 = arith.constant 16 : index
    %c0_44 = arith.constant 0 : index
    %c0_45 = arith.constant 0 : index
    %62 = vector.load %arg2[%c16_43, %c0_44, %c0_45] : memref<30x8x128xf32, #tpu.memory_space<vmem>>, vector<1x8x128xf32>
    %63 = vector.shape_cast %62 : vector<1x8x128xf32> to vector<8x128xf32>
    %64 = arith.subf %61, %63 : vector<8x128xf32>
    %65 = arith.mulf %64, %64 : vector<8x128xf32>
    %66 = arith.addf %59, %65 : vector<8x128xf32>
    %c17 = arith.constant 17 : index
    %c0_46 = arith.constant 0 : index
    %c0_47 = arith.constant 0 : index
    %67 = vector.load %arg1[%c17, %c0_46, %c0_47] : memref<30x8x128xf32, #tpu.memory_space<vmem>>, vector<1x8x128xf32>
    %68 = vector.shape_cast %67 : vector<1x8x128xf32> to vector<8x128xf32>
    %c17_48 = arith.constant 17 : index
    %c0_49 = arith.constant 0 : index
    %c0_50 = arith.constant 0 : index
    %69 = vector.load %arg2[%c17_48, %c0_49, %c0_50] : memref<30x8x128xf32, #tpu.memory_space<vmem>>, vector<1x8x128xf32>
    %70 = vector.shape_cast %69 : vector<1x8x128xf32> to vector<8x128xf32>
    %71 = arith.subf %68, %70 : vector<8x128xf32>
    %72 = arith.mulf %71, %71 : vector<8x128xf32>
    %73 = arith.addf %66, %72 : vector<8x128xf32>
    %c18 = arith.constant 18 : index
    %c0_51 = arith.constant 0 : index
    %c0_52 = arith.constant 0 : index
    %74 = vector.load %arg1[%c18, %c0_51, %c0_52] : memref<30x8x128xf32, #tpu.memory_space<vmem>>, vector<1x8x128xf32>
    %75 = vector.shape_cast %74 : vector<1x8x128xf32> to vector<8x128xf32>
    %c18_53 = arith.constant 18 : index
    %c0_54 = arith.constant 0 : index
    %c0_55 = arith.constant 0 : index
    %76 = vector.load %arg2[%c18_53, %c0_54, %c0_55] : memref<30x8x128xf32, #tpu.memory_space<vmem>>, vector<1x8x128xf32>
    %77 = vector.shape_cast %76 : vector<1x8x128xf32> to vector<8x128xf32>
    %78 = arith.subf %75, %77 : vector<8x128xf32>
    %79 = arith.mulf %78, %78 : vector<8x128xf32>
    %80 = arith.addf %73, %79 : vector<8x128xf32>
    %c19 = arith.constant 19 : index
    %c0_56 = arith.constant 0 : index
    %c0_57 = arith.constant 0 : index
    %81 = vector.load %arg1[%c19, %c0_56, %c0_57] : memref<30x8x128xf32, #tpu.memory_space<vmem>>, vector<1x8x128xf32>
    %82 = vector.shape_cast %81 : vector<1x8x128xf32> to vector<8x128xf32>
    %c19_58 = arith.constant 19 : index
    %c0_59 = arith.constant 0 : index
    %c0_60 = arith.constant 0 : index
    %83 = vector.load %arg2[%c19_58, %c0_59, %c0_60] : memref<30x8x128xf32, #tpu.memory_space<vmem>>, vector<1x8x128xf32>
    %84 = vector.shape_cast %83 : vector<1x8x128xf32> to vector<8x128xf32>
    %85 = arith.subf %82, %84 : vector<8x128xf32>
    %86 = arith.mulf %85, %85 : vector<8x128xf32>
    %87 = arith.addf %80, %86 : vector<8x128xf32>
    %c20 = arith.constant 20 : index
    %c0_61 = arith.constant 0 : index
    %c0_62 = arith.constant 0 : index
    %88 = vector.load %arg1[%c20, %c0_61, %c0_62] : memref<30x8x128xf32, #tpu.memory_space<vmem>>, vector<1x8x128xf32>
    %89 = vector.shape_cast %88 : vector<1x8x128xf32> to vector<8x128xf32>
    %c20_63 = arith.constant 20 : index
    %c0_64 = arith.constant 0 : index
    %c0_65 = arith.constant 0 : index
    %90 = vector.load %arg2[%c20_63, %c0_64, %c0_65] : memref<30x8x128xf32, #tpu.memory_space<vmem>>, vector<1x8x128xf32>
    %91 = vector.shape_cast %90 : vector<1x8x128xf32> to vector<8x128xf32>
    %92 = arith.subf %89, %91 : vector<8x128xf32>
    %93 = arith.mulf %92, %92 : vector<8x128xf32>
    %94 = arith.addf %87, %93 : vector<8x128xf32>
    %c21 = arith.constant 21 : index
    %c0_66 = arith.constant 0 : index
    %c0_67 = arith.constant 0 : index
    %95 = vector.load %arg1[%c21, %c0_66, %c0_67] : memref<30x8x128xf32, #tpu.memory_space<vmem>>, vector<1x8x128xf32>
    %96 = vector.shape_cast %95 : vector<1x8x128xf32> to vector<8x128xf32>
    %c21_68 = arith.constant 21 : index
    %c0_69 = arith.constant 0 : index
    %c0_70 = arith.constant 0 : index
    %97 = vector.load %arg2[%c21_68, %c0_69, %c0_70] : memref<30x8x128xf32, #tpu.memory_space<vmem>>, vector<1x8x128xf32>
    %98 = vector.shape_cast %97 : vector<1x8x128xf32> to vector<8x128xf32>
    %99 = arith.subf %96, %98 : vector<8x128xf32>
    %100 = arith.mulf %99, %99 : vector<8x128xf32>
    %101 = arith.addf %94, %100 : vector<8x128xf32>
    %c22 = arith.constant 22 : index
    %c0_71 = arith.constant 0 : index
    %c0_72 = arith.constant 0 : index
    %102 = vector.load %arg1[%c22, %c0_71, %c0_72] : memref<30x8x128xf32, #tpu.memory_space<vmem>>, vector<1x8x128xf32>
    %103 = vector.shape_cast %102 : vector<1x8x128xf32> to vector<8x128xf32>
    %c22_73 = arith.constant 22 : index
    %c0_74 = arith.constant 0 : index
    %c0_75 = arith.constant 0 : index
    %104 = vector.load %arg2[%c22_73, %c0_74, %c0_75] : memref<30x8x128xf32, #tpu.memory_space<vmem>>, vector<1x8x128xf32>
    %105 = vector.shape_cast %104 : vector<1x8x128xf32> to vector<8x128xf32>
    %106 = arith.subf %103, %105 : vector<8x128xf32>
    %107 = arith.mulf %106, %106 : vector<8x128xf32>
    %108 = arith.addf %101, %107 : vector<8x128xf32>
    %c23 = arith.constant 23 : index
    %c0_76 = arith.constant 0 : index
    %c0_77 = arith.constant 0 : index
    %109 = vector.load %arg1[%c23, %c0_76, %c0_77] : memref<30x8x128xf32, #tpu.memory_space<vmem>>, vector<1x8x128xf32>
    %110 = vector.shape_cast %109 : vector<1x8x128xf32> to vector<8x128xf32>
    %c23_78 = arith.constant 23 : index
    %c0_79 = arith.constant 0 : index
    %c0_80 = arith.constant 0 : index
    %111 = vector.load %arg2[%c23_78, %c0_79, %c0_80] : memref<30x8x128xf32, #tpu.memory_space<vmem>>, vector<1x8x128xf32>
    %112 = vector.shape_cast %111 : vector<1x8x128xf32> to vector<8x128xf32>
    %113 = arith.subf %110, %112 : vector<8x128xf32>
    %114 = arith.mulf %113, %113 : vector<8x128xf32>
    %115 = arith.addf %108, %114 : vector<8x128xf32>
    %c24 = arith.constant 24 : index
    %c0_81 = arith.constant 0 : index
    %c0_82 = arith.constant 0 : index
    %116 = vector.load %arg1[%c24, %c0_81, %c0_82] : memref<30x8x128xf32, #tpu.memory_space<vmem>>, vector<1x8x128xf32>
    %117 = vector.shape_cast %116 : vector<1x8x128xf32> to vector<8x128xf32>
    %c24_83 = arith.constant 24 : index
    %c0_84 = arith.constant 0 : index
    %c0_85 = arith.constant 0 : index
    %118 = vector.load %arg2[%c24_83, %c0_84, %c0_85] : memref<30x8x128xf32, #tpu.memory_space<vmem>>, vector<1x8x128xf32>
    %119 = vector.shape_cast %118 : vector<1x8x128xf32> to vector<8x128xf32>
    %120 = arith.subf %117, %119 : vector<8x128xf32>
    %121 = arith.mulf %120, %120 : vector<8x128xf32>
    %122 = arith.addf %115, %121 : vector<8x128xf32>
    %c25 = arith.constant 25 : index
    %c0_86 = arith.constant 0 : index
    %c0_87 = arith.constant 0 : index
    %123 = vector.load %arg1[%c25, %c0_86, %c0_87] : memref<30x8x128xf32, #tpu.memory_space<vmem>>, vector<1x8x128xf32>
    %124 = vector.shape_cast %123 : vector<1x8x128xf32> to vector<8x128xf32>
    %c25_88 = arith.constant 25 : index
    %c0_89 = arith.constant 0 : index
    %c0_90 = arith.constant 0 : index
    %125 = vector.load %arg2[%c25_88, %c0_89, %c0_90] : memref<30x8x128xf32, #tpu.memory_space<vmem>>, vector<1x8x128xf32>
    %126 = vector.shape_cast %125 : vector<1x8x128xf32> to vector<8x128xf32>
    %127 = arith.subf %124, %126 : vector<8x128xf32>
    %128 = arith.mulf %127, %127 : vector<8x128xf32>
    %129 = arith.addf %122, %128 : vector<8x128xf32>
    %c26 = arith.constant 26 : index
    %c0_91 = arith.constant 0 : index
    %c0_92 = arith.constant 0 : index
    %130 = vector.load %arg1[%c26, %c0_91, %c0_92] : memref<30x8x128xf32, #tpu.memory_space<vmem>>, vector<1x8x128xf32>
    %131 = vector.shape_cast %130 : vector<1x8x128xf32> to vector<8x128xf32>
    %c26_93 = arith.constant 26 : index
    %c0_94 = arith.constant 0 : index
    %c0_95 = arith.constant 0 : index
    %132 = vector.load %arg2[%c26_93, %c0_94, %c0_95] : memref<30x8x128xf32, #tpu.memory_space<vmem>>, vector<1x8x128xf32>
    %133 = vector.shape_cast %132 : vector<1x8x128xf32> to vector<8x128xf32>
    %134 = arith.subf %131, %133 : vector<8x128xf32>
    %135 = arith.mulf %134, %134 : vector<8x128xf32>
    %136 = arith.addf %129, %135 : vector<8x128xf32>
    %c27 = arith.constant 27 : index
    %c0_96 = arith.constant 0 : index
    %c0_97 = arith.constant 0 : index
    %137 = vector.load %arg1[%c27, %c0_96, %c0_97] : memref<30x8x128xf32, #tpu.memory_space<vmem>>, vector<1x8x128xf32>
    %138 = vector.shape_cast %137 : vector<1x8x128xf32> to vector<8x128xf32>
    %c27_98 = arith.constant 27 : index
    %c0_99 = arith.constant 0 : index
    %c0_100 = arith.constant 0 : index
    %139 = vector.load %arg2[%c27_98, %c0_99, %c0_100] : memref<30x8x128xf32, #tpu.memory_space<vmem>>, vector<1x8x128xf32>
    %140 = vector.shape_cast %139 : vector<1x8x128xf32> to vector<8x128xf32>
    %141 = arith.subf %138, %140 : vector<8x128xf32>
    %142 = arith.mulf %141, %141 : vector<8x128xf32>
    %143 = arith.addf %136, %142 : vector<8x128xf32>
    %c28 = arith.constant 28 : index
    %c0_101 = arith.constant 0 : index
    %c0_102 = arith.constant 0 : index
    %144 = vector.load %arg1[%c28, %c0_101, %c0_102] : memref<30x8x128xf32, #tpu.memory_space<vmem>>, vector<1x8x128xf32>
    %145 = vector.shape_cast %144 : vector<1x8x128xf32> to vector<8x128xf32>
    %c28_103 = arith.constant 28 : index
    %c0_104 = arith.constant 0 : index
    %c0_105 = arith.constant 0 : index
    %146 = vector.load %arg2[%c28_103, %c0_104, %c0_105] : memref<30x8x128xf32, #tpu.memory_space<vmem>>, vector<1x8x128xf32>
    %147 = vector.shape_cast %146 : vector<1x8x128xf32> to vector<8x128xf32>
    %148 = arith.subf %145, %147 : vector<8x128xf32>
    %149 = arith.mulf %148, %148 : vector<8x128xf32>
    %150 = arith.addf %143, %149 : vector<8x128xf32>
    %c29 = arith.constant 29 : index
    %c0_106 = arith.constant 0 : index
    %c0_107 = arith.constant 0 : index
    %151 = vector.load %arg1[%c29, %c0_106, %c0_107] : memref<30x8x128xf32, #tpu.memory_space<vmem>>, vector<1x8x128xf32>
    %152 = vector.shape_cast %151 : vector<1x8x128xf32> to vector<8x128xf32>
    %c29_108 = arith.constant 29 : index
    %c0_109 = arith.constant 0 : index
    %c0_110 = arith.constant 0 : index
    %153 = vector.load %arg2[%c29_108, %c0_109, %c0_110] : memref<30x8x128xf32, #tpu.memory_space<vmem>>, vector<1x8x128xf32>
    %154 = vector.shape_cast %153 : vector<1x8x128xf32> to vector<8x128xf32>
    %155 = arith.subf %152, %154 : vector<8x128xf32>
    %156 = arith.mulf %155, %155 : vector<8x128xf32>
    %157 = arith.addf %150, %156 : vector<8x128xf32>
    %c0_111 = arith.constant 0 : index
    %c0_112 = arith.constant 0 : index
    %c0_113 = arith.constant 0 : index
    %158 = vector.load %arg1[%c0_111, %c0_112, %c0_113] : memref<30x8x128xf32, #tpu.memory_space<vmem>>, vector<1x8x128xf32>
    %159 = vector.shape_cast %158 : vector<1x8x128xf32> to vector<8x128xf32>
    %c1 = arith.constant 1 : index
    %c0_114 = arith.constant 0 : index
    %c0_115 = arith.constant 0 : index
    %160 = vector.load %arg1[%c1, %c0_114, %c0_115] : memref<30x8x128xf32, #tpu.memory_space<vmem>>, vector<1x8x128xf32>
    %161 = vector.shape_cast %160 : vector<1x8x128xf32> to vector<8x128xf32>
    %c2 = arith.constant 2 : index
    %c0_116 = arith.constant 0 : index
    %c0_117 = arith.constant 0 : index
    %162 = vector.load %arg1[%c2, %c0_116, %c0_117] : memref<30x8x128xf32, #tpu.memory_space<vmem>>, vector<1x8x128xf32>
    %163 = vector.shape_cast %162 : vector<1x8x128xf32> to vector<8x128xf32>
    %c3 = arith.constant 3 : index
    %c0_118 = arith.constant 0 : index
    %c0_119 = arith.constant 0 : index
    %164 = vector.load %arg1[%c3, %c0_118, %c0_119] : memref<30x8x128xf32, #tpu.memory_space<vmem>>, vector<1x8x128xf32>
    %165 = vector.shape_cast %164 : vector<1x8x128xf32> to vector<8x128xf32>
    %c5 = arith.constant 5 : index
    %c0_120 = arith.constant 0 : index
    %c0_121 = arith.constant 0 : index
    %166 = vector.load %arg1[%c5, %c0_120, %c0_121] : memref<30x8x128xf32, #tpu.memory_space<vmem>>, vector<1x8x128xf32>
    %167 = vector.shape_cast %166 : vector<1x8x128xf32> to vector<8x128xf32>
    %c6 = arith.constant 6 : index
    %c0_122 = arith.constant 0 : index
    %c0_123 = arith.constant 0 : index
    %168 = vector.load %arg1[%c6, %c0_122, %c0_123] : memref<30x8x128xf32, #tpu.memory_space<vmem>>, vector<1x8x128xf32>
    %169 = vector.shape_cast %168 : vector<1x8x128xf32> to vector<8x128xf32>
    %c7 = arith.constant 7 : index
    %c0_124 = arith.constant 0 : index
    %c0_125 = arith.constant 0 : index
    %170 = vector.load %arg1[%c7, %c0_124, %c0_125] : memref<30x8x128xf32, #tpu.memory_space<vmem>>, vector<1x8x128xf32>
    %171 = vector.shape_cast %170 : vector<1x8x128xf32> to vector<8x128xf32>
    %c8 = arith.constant 8 : index
    %c0_126 = arith.constant 0 : index
    %c0_127 = arith.constant 0 : index
    %172 = vector.load %arg1[%c8, %c0_126, %c0_127] : memref<30x8x128xf32, #tpu.memory_space<vmem>>, vector<1x8x128xf32>
    %173 = vector.shape_cast %172 : vector<1x8x128xf32> to vector<8x128xf32>
    %c0_128 = arith.constant 0 : index
    %c0_129 = arith.constant 0 : index
    %c0_130 = arith.constant 0 : index
    %174 = vector.load %arg2[%c0_128, %c0_129, %c0_130] : memref<30x8x128xf32, #tpu.memory_space<vmem>>, vector<1x8x128xf32>
    %175 = vector.shape_cast %174 : vector<1x8x128xf32> to vector<8x128xf32>
    %c1_131 = arith.constant 1 : index
    %c0_132 = arith.constant 0 : index
    %c0_133 = arith.constant 0 : index
    %176 = vector.load %arg2[%c1_131, %c0_132, %c0_133] : memref<30x8x128xf32, #tpu.memory_space<vmem>>, vector<1x8x128xf32>
    %177 = vector.shape_cast %176 : vector<1x8x128xf32> to vector<8x128xf32>
    %c2_134 = arith.constant 2 : index
    %c0_135 = arith.constant 0 : index
    %c0_136 = arith.constant 0 : index
    %178 = vector.load %arg2[%c2_134, %c0_135, %c0_136] : memref<30x8x128xf32, #tpu.memory_space<vmem>>, vector<1x8x128xf32>
    %179 = vector.shape_cast %178 : vector<1x8x128xf32> to vector<8x128xf32>
    %c3_137 = arith.constant 3 : index
    %c0_138 = arith.constant 0 : index
    %c0_139 = arith.constant 0 : index
    %180 = vector.load %arg2[%c3_137, %c0_138, %c0_139] : memref<30x8x128xf32, #tpu.memory_space<vmem>>, vector<1x8x128xf32>
    %181 = vector.shape_cast %180 : vector<1x8x128xf32> to vector<8x128xf32>
    %cst_140 = arith.constant 0.0714285746 : f32
    %182 = vector.broadcast %cst_140 : f32 to vector<8x128xf32>
    %183 = arith.mulf %159, %182 : vector<8x128xf32>
    %cst_141 = arith.constant 0.0714285746 : f32
    %184 = vector.broadcast %cst_141 : f32 to vector<8x128xf32>
    %185 = arith.mulf %161, %184 : vector<8x128xf32>
    %cst_142 = arith.constant 5.000000e-01 : f32
    %186 = vector.broadcast %cst_142 : f32 to vector<8x128xf32>
    %187 = arith.mulf %186, %163 : vector<8x128xf32>
    %cst_143 = arith.constant 5.000000e-01 : f32
    %188 = vector.broadcast %cst_143 : f32 to vector<8x128xf32>
    %189 = arith.mulf %188, %165 : vector<8x128xf32>
    %190 = arith.subf %183, %187 : vector<8x128xf32>
    %191 = arith.subf %185, %189 : vector<8x128xf32>
    %192 = arith.addf %183, %187 : vector<8x128xf32>
    %193 = arith.addf %185, %189 : vector<8x128xf32>
    %cst_144 = arith.constant 0.0714285746 : f32
    %194 = vector.broadcast %cst_144 : f32 to vector<8x128xf32>
    %195 = arith.mulf %167, %194 : vector<8x128xf32>
    %cst_145 = arith.constant 0.0714285746 : f32
    %196 = vector.broadcast %cst_145 : f32 to vector<8x128xf32>
    %197 = arith.mulf %169, %196 : vector<8x128xf32>
    %cst_146 = arith.constant 5.000000e-01 : f32
    %198 = vector.broadcast %cst_146 : f32 to vector<8x128xf32>
    %199 = arith.mulf %198, %171 : vector<8x128xf32>
    %cst_147 = arith.constant 5.000000e-01 : f32
    %200 = vector.broadcast %cst_147 : f32 to vector<8x128xf32>
    %201 = arith.mulf %200, %173 : vector<8x128xf32>
    %202 = arith.subf %195, %199 : vector<8x128xf32>
    %203 = arith.subf %197, %201 : vector<8x128xf32>
    %204 = arith.addf %195, %199 : vector<8x128xf32>
    %205 = arith.addf %197, %201 : vector<8x128xf32>
    %cst_148 = arith.constant 0.0714285746 : f32
    %206 = vector.broadcast %cst_148 : f32 to vector<8x128xf32>
    %207 = arith.mulf %175, %206 : vector<8x128xf32>
    %cst_149 = arith.constant 0.0714285746 : f32
    %208 = vector.broadcast %cst_149 : f32 to vector<8x128xf32>
    %209 = arith.mulf %177, %208 : vector<8x128xf32>
    %cst_150 = arith.constant 5.000000e-01 : f32
    %210 = vector.broadcast %cst_150 : f32 to vector<8x128xf32>
    %211 = arith.mulf %210, %179 : vector<8x128xf32>
    %cst_151 = arith.constant 5.000000e-01 : f32
    %212 = vector.broadcast %cst_151 : f32 to vector<8x128xf32>
    %213 = arith.mulf %212, %181 : vector<8x128xf32>
    %214 = arith.subf %207, %211 : vector<8x128xf32>
    %215 = arith.subf %209, %213 : vector<8x128xf32>
    %216 = arith.addf %207, %211 : vector<8x128xf32>
    %217 = arith.addf %209, %213 : vector<8x128xf32>
    %218 = arith.maximumf %190, %214 : vector<8x128xf32>
    %219 = arith.maximumf %191, %215 : vector<8x128xf32>
    %220 = arith.minimumf %192, %216 : vector<8x128xf32>
    %221 = arith.minimumf %193, %217 : vector<8x128xf32>
    %222 = arith.subf %220, %218 : vector<8x128xf32>
    %cst_152 = arith.constant 0.000000e+00 : f32
    %223 = vector.broadcast %cst_152 : f32 to vector<8x128xf32>
    %224 = arith.maximumf %222, %223 : vector<8x128xf32>
    %225 = arith.subf %221, %219 : vector<8x128xf32>
    %cst_153 = arith.constant 0.000000e+00 : f32
    %226 = vector.broadcast %cst_153 : f32 to vector<8x128xf32>
    %227 = arith.maximumf %225, %226 : vector<8x128xf32>
    %228 = arith.mulf %224, %227 : vector<8x128xf32>
    %229 = arith.subf %192, %190 : vector<8x128xf32>
    %230 = arith.subf %193, %191 : vector<8x128xf32>
    %231 = arith.mulf %229, %230 : vector<8x128xf32>
    %232 = arith.subf %216, %214 : vector<8x128xf32>
    %233 = arith.subf %217, %215 : vector<8x128xf32>
    %234 = arith.mulf %232, %233 : vector<8x128xf32>
    %235 = arith.addf %231, %234 : vector<8x128xf32>
    %236 = arith.subf %235, %228 : vector<8x128xf32>
    %cst_154 = arith.constant 1.000000e-10 : f32
    %237 = vector.broadcast %cst_154 : f32 to vector<8x128xf32>
    %238 = arith.addf %236, %237 : vector<8x128xf32>
    %239 = arith.divf %228, %238 : vector<8x128xf32>
    %240 = arith.maximumf %202, %214 : vector<8x128xf32>
    %241 = arith.maximumf %203, %215 : vector<8x128xf32>
    %242 = arith.minimumf %204, %216 : vector<8x128xf32>
    %243 = arith.minimumf %205, %217 : vector<8x128xf32>
    %244 = arith.subf %242, %240 : vector<8x128xf32>
    %cst_155 = arith.constant 0.000000e+00 : f32
    %245 = vector.broadcast %cst_155 : f32 to vector<8x128xf32>
    %246 = arith.maximumf %244, %245 : vector<8x128xf32>
    %247 = arith.subf %243, %241 : vector<8x128xf32>
    %cst_156 = arith.constant 0.000000e+00 : f32
    %248 = vector.broadcast %cst_156 : f32 to vector<8x128xf32>
    %249 = arith.maximumf %247, %248 : vector<8x128xf32>
    %250 = arith.mulf %246, %249 : vector<8x128xf32>
    %251 = arith.subf %204, %202 : vector<8x128xf32>
    %252 = arith.subf %205, %203 : vector<8x128xf32>
    %253 = arith.mulf %251, %252 : vector<8x128xf32>
    %254 = arith.subf %216, %214 : vector<8x128xf32>
    %255 = arith.subf %217, %215 : vector<8x128xf32>
    %256 = arith.mulf %254, %255 : vector<8x128xf32>
    %257 = arith.addf %253, %256 : vector<8x128xf32>
    %258 = arith.subf %257, %250 : vector<8x128xf32>
    %cst_157 = arith.constant 1.000000e-10 : f32
    %259 = vector.broadcast %cst_157 : f32 to vector<8x128xf32>
    %260 = arith.addf %258, %259 : vector<8x128xf32>
    %261 = arith.divf %250, %260 : vector<8x128xf32>
    %262 = arith.cmpf ogt, %261, %239 : vector<8x128xf32>
    %263 = arith.maximumf %239, %261 : vector<8x128xf32>
    %264 = arith.select %262, %167, %159 : vector<8x128xi1>, vector<8x128xf32>
    %265 = arith.select %262, %169, %161 : vector<8x128xi1>, vector<8x128xf32>
    %266 = arith.select %262, %171, %163 : vector<8x128xi1>, vector<8x128xf32>
    %267 = arith.select %262, %173, %165 : vector<8x128xi1>, vector<8x128xf32>
    %c9_158 = arith.constant 9 : index
    %c0_159 = arith.constant 0 : index
    %c0_160 = arith.constant 0 : index
    %268 = vector.load %arg1[%c9_158, %c0_159, %c0_160] : memref<30x8x128xf32, #tpu.memory_space<vmem>>, vector<1x8x128xf32>
    %269 = vector.shape_cast %268 : vector<1x8x128xf32> to vector<8x128xf32>
    %c4_161 = arith.constant 4 : index
    %c0_162 = arith.constant 0 : index
    %c0_163 = arith.constant 0 : index
    %270 = vector.load %arg1[%c4_161, %c0_162, %c0_163] : memref<30x8x128xf32, #tpu.memory_space<vmem>>, vector<1x8x128xf32>
    %271 = vector.shape_cast %270 : vector<1x8x128xf32> to vector<8x128xf32>
    %272 = arith.select %262, %269, %271 : vector<8x128xi1>, vector<8x128xf32>
    %c4_164 = arith.constant 4 : index
    %c0_165 = arith.constant 0 : index
    %c0_166 = arith.constant 0 : index
    %273 = vector.load %arg1[%c4_164, %c0_165, %c0_166] : memref<30x8x128xf32, #tpu.memory_space<vmem>>, vector<1x8x128xf32>
    %274 = vector.shape_cast %273 : vector<1x8x128xf32> to vector<8x128xf32>
    %c9_167 = arith.constant 9 : index
    %c0_168 = arith.constant 0 : index
    %c0_169 = arith.constant 0 : index
    %275 = vector.load %arg1[%c9_167, %c0_168, %c0_169] : memref<30x8x128xf32, #tpu.memory_space<vmem>>, vector<1x8x128xf32>
    %276 = vector.shape_cast %275 : vector<1x8x128xf32> to vector<8x128xf32>
    %277 = arith.select %262, %274, %276 : vector<8x128xi1>, vector<8x128xf32>
    %c5_170 = arith.constant 5 : index
    %c0_171 = arith.constant 0 : index
    %c0_172 = arith.constant 0 : index
    %278 = vector.load %arg2[%c5_170, %c0_171, %c0_172] : memref<30x8x128xf32, #tpu.memory_space<vmem>>, vector<1x8x128xf32>
    %279 = vector.shape_cast %278 : vector<1x8x128xf32> to vector<8x128xf32>
    %280 = arith.select %262, %279, %175 : vector<8x128xi1>, vector<8x128xf32>
    %c6_173 = arith.constant 6 : index
    %c0_174 = arith.constant 0 : index
    %c0_175 = arith.constant 0 : index
    %281 = vector.load %arg2[%c6_173, %c0_174, %c0_175] : memref<30x8x128xf32, #tpu.memory_space<vmem>>, vector<1x8x128xf32>
    %282 = vector.shape_cast %281 : vector<1x8x128xf32> to vector<8x128xf32>
    %283 = arith.select %262, %282, %177 : vector<8x128xi1>, vector<8x128xf32>
    %c7_176 = arith.constant 7 : index
    %c0_177 = arith.constant 0 : index
    %c0_178 = arith.constant 0 : index
    %284 = vector.load %arg2[%c7_176, %c0_177, %c0_178] : memref<30x8x128xf32, #tpu.memory_space<vmem>>, vector<1x8x128xf32>
    %285 = vector.shape_cast %284 : vector<1x8x128xf32> to vector<8x128xf32>
    %286 = arith.select %262, %285, %179 : vector<8x128xi1>, vector<8x128xf32>
    %c8_179 = arith.constant 8 : index
    %c0_180 = arith.constant 0 : index
    %c0_181 = arith.constant 0 : index
    %287 = vector.load %arg2[%c8_179, %c0_180, %c0_181] : memref<30x8x128xf32, #tpu.memory_space<vmem>>, vector<1x8x128xf32>
    %288 = vector.shape_cast %287 : vector<1x8x128xf32> to vector<8x128xf32>
    %289 = arith.select %262, %288, %181 : vector<8x128xi1>, vector<8x128xf32>
    %290 = arith.subf %264, %280 : vector<8x128xf32>
    %291 = arith.subf %265, %283 : vector<8x128xf32>
    %cst_182 = arith.constant 0.000000e+00 : f32
    %292 = vector.broadcast %cst_182 : f32 to vector<8x128xf32>
    %293 = arith.maximumf %266, %292 : vector<8x128xf32>
    %294 = math.sqrt %293 : vector<8x128xf32>
    %cst_183 = arith.constant 0.000000e+00 : f32
    %295 = vector.broadcast %cst_183 : f32 to vector<8x128xf32>
    %296 = arith.maximumf %286, %295 : vector<8x128xf32>
    %297 = math.sqrt %296 : vector<8x128xf32>
    %298 = arith.subf %294, %297 : vector<8x128xf32>
    %cst_184 = arith.constant 0.000000e+00 : f32
    %299 = vector.broadcast %cst_184 : f32 to vector<8x128xf32>
    %300 = arith.maximumf %267, %299 : vector<8x128xf32>
    %301 = math.sqrt %300 : vector<8x128xf32>
    %cst_185 = arith.constant 0.000000e+00 : f32
    %302 = vector.broadcast %cst_185 : f32 to vector<8x128xf32>
    %303 = arith.maximumf %289, %302 : vector<8x128xf32>
    %304 = math.sqrt %303 : vector<8x128xf32>
    %305 = arith.subf %301, %304 : vector<8x128xf32>
    %306 = arith.mulf %290, %290 : vector<8x128xf32>
    %307 = arith.mulf %291, %291 : vector<8x128xf32>
    %308 = arith.addf %306, %307 : vector<8x128xf32>
    %309 = arith.mulf %298, %298 : vector<8x128xf32>
    %310 = arith.addf %308, %309 : vector<8x128xf32>
    %311 = arith.mulf %305, %305 : vector<8x128xf32>
    %312 = arith.addf %310, %311 : vector<8x128xf32>
    %313 = arith.subf %272, %263 : vector<8x128xf32>
    %314 = arith.mulf %313, %313 : vector<8x128xf32>
    %315 = arith.mulf %277, %277 : vector<8x128xf32>
    %cst_186 = arith.constant 5.000000e+00 : f32
    %316 = vector.broadcast %cst_186 : f32 to vector<8x128xf32>
    %317 = arith.mulf %316, %312 : vector<8x128xf32>
    %cst_187 = arith.constant 2.000000e+00 : f32
    %318 = vector.broadcast %cst_187 : f32 to vector<8x128xf32>
    %319 = arith.mulf %318, %314 : vector<8x128xf32>
    %320 = arith.addf %317, %319 : vector<8x128xf32>
    %321 = arith.addf %320, %315 : vector<8x128xf32>
    %322 = arith.addf %321, %157 : vector<8x128xf32>
    %cst_188 = arith.constant 5.000000e-01 : f32
    %323 = vector.broadcast %cst_188 : f32 to vector<8x128xf32>
    %324 = arith.mulf %323, %16 : vector<8x128xf32>
    %cst_189 = arith.constant 0.000000e+00 : f32
    %325 = vector.broadcast %cst_189 : f32 to vector<8x128xf32>
    %326 = arith.select %5, %324, %325 : vector<8x128xi1>, vector<8x128xf32>
    %327 = arith.select %3, %322, %326 : vector<8x128xi1>, vector<8x128xf32>
    %cst_190 = arith.constant dense<0.000000e+00> : vector<128xf32>
    %328 = vector.multi_reduction <add>, %327, %cst_190 [0] : vector<8x128xf32> to vector<128xf32>
    %329 = vector.shape_cast %328 : vector<128xf32> to vector<1x128xf32>
    %330 = vector.shape_cast %329 : vector<1x128xf32> to vector<1x1x128xf32>
    %c0_191 = arith.constant 0 : index
    %c0_192 = arith.constant 0 : index
    %c0_193 = arith.constant 0 : index
    %331 = vector.load %arg3[%c0_191, %c0_192, %c0_193] : memref<1x1x128xf32, #tpu.memory_space<vmem>>, vector<1x1x128xf32>
    tpu.vector_store %arg3[%c0_191, %c0_192, %c0_193], %330 {strides = array<i32>} : memref<1x1x128xf32, #tpu.memory_space<vmem>>, vector<1x1x128xf32>,
    return
  }
  func.func @transform_0(%arg0: i32) -> (i32, i32, i32) {
    %c0_i32 = arith.constant 0 : i32
    %c0_i32_0 = arith.constant 0 : i32
    %c0_i32_1 = arith.constant 0 : i32
    return %c0_i32, %arg0, %c0_i32_0 : i32, i32, i32
  }
  func.func @transform_1(%arg0: i32) -> (i32, i32, i32) {
    %c0_i32 = arith.constant 0 : i32
    %c0_i32_0 = arith.constant 0 : i32
    %c0_i32_1 = arith.constant 0 : i32
    return %c0_i32, %arg0, %c0_i32_0 : i32, i32, i32
  }
  func.func @transform_2(%arg0: i32) -> (i32, i32, i32) {
    %c0_i32 = arith.constant 0 : i32
    %c0_i32_0 = arith.constant 0 : i32
    %c0_i32_1 = arith.constant 0 : i32
    return %arg0, %c0_i32, %c0_i32_0 : i32, i32, i32
  }
}

</mosaic_0001>

<llo_original>
// kernel: yolo_loss_pallas.1
$region0: #{yolo_loss_pallas.1}
  #allocation0 [shape = 'u32[]', space=smem, size = 0x4, offset = 0x4, fixed_abs, tag = 'smem constant byte address 0x4 - core index']
  #allocation1 [shape = 'u32[72,128]{1,0:T(1,128)}', space=vmem, size = 0x9000, scoped, tag = 'internal scratch']
  %s0 = inlined_call_operand.vmem [shape: f32[30,8,128], index: 0, kind: input, shape index: {}]
  %s1 = inlined_call_operand.vmem [shape: f32[30,8,128], index: 1, kind: input, shape index: {}]
  %s2 = inlined_call_operand.vmem [shape: f32[1,1,128], index: 2, kind: output, shape index: {}]
  %s3 = sld [smem:[#allocation0]]
  $region18: #{yolo_loss_pallas.1} parent=0
    _
  %s5 = ssub.s32 1, %s3
  %s6 = scalar_select 0, %s5, %s3
  // Predicated region
  $region2: #{yolo_loss_pallas.1} parent=0 // pred_check
    _
  $region3: #{yolo_loss_pallas.1} parent=0 // pred_check_branch
    %8 = sbr.rel (0) target = $region5
  $region4: #{yolo_loss_pallas.1} parent=0 // pred_region
    _
  $region5: #{yolo_loss_pallas.1} parent=0 // pred_fallthru
    _
  // Predicated region
  $region6: #{yolo_loss_pallas.1} parent=0 // pred_check
    _
  $region7: #{yolo_loss_pallas.1} parent=0 // pred_check_branch
    %10 = sbr.rel (0) target = $region9
  $region8: #{yolo_loss_pallas.1} parent=0 // pred_region
    _
  $region9: #{yolo_loss_pallas.1} parent=0 // pred_fallthru
    _
  %s11 = scalar_lea.vmem %s1, 32
  %v12 = vld [vmem:[%s11] sm:$0xff]
  %vm13 = vcmp.gt.f32.partialorder %v12, 0.0
  %vm14 = vcmp.eq.f32.partialorder %v12, 0.0
  %s15 = scalar_lea.vmem %s0, 32
  %v16 = vld [vmem:[%s15] sm:$0xff]
  %v17 = vsub.f32 %v16, %v12
  %s18 = scalar_lea.vmem %s0, 72
  %v19 = vld [vmem:[%s18] sm:$0xff]
  %s20 = scalar_lea.vmem %s1, 72
  %v21 = vld [vmem:[%s20] sm:$0xff]
  %v22 = vsub.f32 %v19, %v21
  %v23 = vmul.f32 %v17, %v17
  %v24 = vmul.f32 %v22, %v22
  %v25 = vadd.f32 %v23, %v24
  %s26 = scalar_lea.vmem %s0, 80
  %v27 = vld [vmem:[%s26] sm:$0xff]
  %s28 = scalar_lea.vmem %s1, 80
  %v29 = vld [vmem:[%s28] sm:$0xff]
  %v30 = vsub.f32 %v27, %v29
  %v31 = vmul.f32 %v30, %v30
  %v32 = vadd.f32 %v31, 0.0
  %s33 = scalar_lea.vmem %s0, 88
  %v34 = vld [vmem:[%s33] sm:$0xff]
  %s35 = scalar_lea.vmem %s1, 88
  %v36 = vld [vmem:[%s35] sm:$0xff]
  %v37 = vsub.f32 %v34, %v36
  %v38 = vmul.f32 %v37, %v37
  %v39 = vadd.f32 %v32, %v38
  %s40 = scalar_lea.vmem %s0, 96
  %v41 = vld [vmem:[%s40] sm:$0xff]
  %s42 = scalar_lea.vmem %s1, 96
  %v43 = vld [vmem:[%s42] sm:$0xff]
  %v44 = vsub.f32 %v41, %v43
  %v45 = vmul.f32 %v44, %v44
  %v46 = vadd.f32 %v39, %v45
  %s47 = scalar_lea.vmem %s0, 104
  %v48 = vld [vmem:[%s47] sm:$0xff]
  %s49 = scalar_lea.vmem %s1, 104
  %v50 = vld [vmem:[%s49] sm:$0xff]
  %v51 = vsub.f32 %v48, %v50
  %v52 = vmul.f32 %v51, %v51
  %v53 = vadd.f32 %v46, %v52
  %s54 = scalar_lea.vmem %s0, 112
  %v55 = vld [vmem:[%s54] sm:$0xff]
  %s56 = scalar_lea.vmem %s1, 112
  %v57 = vld [vmem:[%s56] sm:$0xff]
  %v58 = vsub.f32 %v55, %v57
  %v59 = vmul.f32 %v58, %v58
  %v60 = vadd.f32 %v53, %v59
  %s61 = scalar_lea.vmem %s0, 120
  %v62 = vld [vmem:[%s61] sm:$0xff]
  %s63 = scalar_lea.vmem %s1, 120
  %v64 = vld [vmem:[%s63] sm:$0xff]
  %v65 = vsub.f32 %v62, %v64
  %v66 = vmul.f32 %v65, %v65
  %v67 = vadd.f32 %v60, %v66
  %s68 = scalar_lea.vmem %s0, 128
  %v69 = vld [vmem:[%s68] sm:$0xff]
  %s70 = scalar_lea.vmem %s1, 128
  %v71 = vld [vmem:[%s70] sm:$0xff]
  %v72 = vsub.f32 %v69, %v71
  %v73 = vmul.f32 %v72, %v72
  %v74 = vadd.f32 %v67, %v73
  %s75 = scalar_lea.vmem %s0, 136
  %v76 = vld [vmem:[%s75] sm:$0xff]
  %s77 = scalar_lea.vmem %s1, 136
  %v78 = vld [vmem:[%s77] sm:$0xff]
  %v79 = vsub.f32 %v76, %v78
  %v80 = vmul.f32 %v79, %v79
  %v81 = vadd.f32 %v74, %v80
  %s82 = scalar_lea.vmem %s0, 144
  %v83 = vld [vmem:[%s82] sm:$0xff]
  %s84 = scalar_lea.vmem %s1, 144
  %v85 = vld [vmem:[%s84] sm:$0xff]
  %v86 = vsub.f32 %v83, %v85
  %v87 = vmul.f32 %v86, %v86
  %v88 = vadd.f32 %v81, %v87
  %s89 = scalar_lea.vmem %s0, 152
  %v90 = vld [vmem:[%s89] sm:$0xff]
  %s91 = scalar_lea.vmem %s1, 152
  %v92 = vld [vmem:[%s91] sm:$0xff]
  %v93 = vsub.f32 %v90, %v92
  %v94 = vmul.f32 %v93, %v93
  %v95 = vadd.f32 %v88, %v94
  %s96 = scalar_lea.vmem %s0, 160
  %v97 = vld [vmem:[%s96] sm:$0xff]
  %s98 = scalar_lea.vmem %s1, 160
  %v99 = vld [vmem:[%s98] sm:$0xff]
  %v100 = vsub.f32 %v97, %v99
  %v101 = vmul.f32 %v100, %v100
  %v102 = vadd.f32 %v95, %v101
  %s103 = scalar_lea.vmem %s0, 168
  %v104 = vld [vmem:[%s103] sm:$0xff]
  %s105 = scalar_lea.vmem %s1, 168
  %v106 = vld [vmem:[%s105] sm:$0xff]
  %v107 = vsub.f32 %v104, %v106
  %v108 = vmul.f32 %v107, %v107
  %v109 = vadd.f32 %v102, %v108
  %s110 = scalar_lea.vmem %s0, 176
  %v111 = vld [vmem:[%s110] sm:$0xff]
  %s112 = scalar_lea.vmem %s1, 176
  %v113 = vld [vmem:[%s112] sm:$0xff]
  %v114 = vsub.f32 %v111, %v113
  %v115 = vmul.f32 %v114, %v114
  %v116 = vadd.f32 %v109, %v115
  %s117 = scalar_lea.vmem %s0, 184
  %v118 = vld [vmem:[%s117] sm:$0xff]
  %s119 = scalar_lea.vmem %s1, 184
  %v120 = vld [vmem:[%s119] sm:$0xff]
  %v121 = vsub.f32 %v118, %v120
  %v122 = vmul.f32 %v121, %v121
  %v123 = vadd.f32 %v116, %v122
  %s124 = scalar_lea.vmem %s0, 192
  %v125 = vld [vmem:[%s124] sm:$0xff]
  %s126 = scalar_lea.vmem %s1, 192
  %v127 = vld [vmem:[%s126] sm:$0xff]
  %v128 = vsub.f32 %v125, %v127
  %v129 = vmul.f32 %v128, %v128
  %v130 = vadd.f32 %v123, %v129
  %s131 = scalar_lea.vmem %s0, 200
  %v132 = vld [vmem:[%s131] sm:$0xff]
  %s133 = scalar_lea.vmem %s1, 200
  %v134 = vld [vmem:[%s133] sm:$0xff]
  %v135 = vsub.f32 %v132, %v134
  %v136 = vmul.f32 %v135, %v135
  %v137 = vadd.f32 %v130, %v136
  %s138 = scalar_lea.vmem %s0, 208
  %v139 = vld [vmem:[%s138] sm:$0xff]
  %s140 = scalar_lea.vmem %s1, 208
  %v141 = vld [vmem:[%s140] sm:$0xff]
  %v142 = vsub.f32 %v139, %v141
  %v143 = vmul.f32 %v142, %v142
  %v144 = vadd.f32 %v137, %v143
  %s145 = scalar_lea.vmem %s0, 216
  %v146 = vld [vmem:[%s145] sm:$0xff]
  %s147 = scalar_lea.vmem %s1, 216
  %v148 = vld [vmem:[%s147] sm:$0xff]
  %v149 = vsub.f32 %v146, %v148
  %v150 = vmul.f32 %v149, %v149
  %v151 = vadd.f32 %v144, %v150
  %s152 = scalar_lea.vmem %s0, 224
  %v153 = vld [vmem:[%s152] sm:$0xff]
  %s154 = scalar_lea.vmem %s1, 224
  %v155 = vld [vmem:[%s154] sm:$0xff]
  %v156 = vsub.f32 %v153, %v155
  %v157 = vmul.f32 %v156, %v156
  %v158 = vadd.f32 %v151, %v157
  %s159 = scalar_lea.vmem %s0, 232
  %v160 = vld [vmem:[%s159] sm:$0xff]
  %s161 = scalar_lea.vmem %s1, 232
  %v162 = vld [vmem:[%s161] sm:$0xff]
  %v163 = vsub.f32 %v160, %v162
  %v164 = vmul.f32 %v163, %v163
  %v165 = vadd.f32 %v158, %v164
  %v166 = vld [vmem:[%s0] sm:$0xff]
  %s167 = scalar_lea.vmem %s0, 8
  %v168 = vld [vmem:[%s167] sm:$0xff]
  %s169 = scalar_lea.vmem %s0, 16
  %v170 = vld [vmem:[%s169] sm:$0xff]
  %s171 = scalar_lea.vmem %s0, 24
  %v172 = vld [vmem:[%s171] sm:$0xff]
  %s173 = scalar_lea.vmem %s0, 40
  %v174 = vld [vmem:[%s173] sm:$0xff]
  %s175 = scalar_lea.vmem %s0, 48
  %v176 = vld [vmem:[%s175] sm:$0xff]
  %s177 = scalar_lea.vmem %s0, 56
  %v178 = vld [vmem:[%s177] sm:$0xff]
  %s179 = scalar_lea.vmem %s0, 64
  %v180 = vld [vmem:[%s179] sm:$0xff]
  %v181 = vld [vmem:[%s1] sm:$0xff]
  %s182 = scalar_lea.vmem %s1, 8
  %v183 = vld [vmem:[%s182] sm:$0xff]
  %s184 = scalar_lea.vmem %s1, 16
  %v185 = vld [vmem:[%s184] sm:$0xff]
  %s186 = scalar_lea.vmem %s1, 24
  %v187 = vld [vmem:[%s186] sm:$0xff]
  %v188 = vmul.f32 %v166, 0.071428575
  %v189 = vmul.f32 %v168, 0.071428575
  %v190 = vmul.f32 %v170, 0.5
  %v191 = vmul.f32 %v172, 0.5
  %v192 = vsub.f32 %v188, %v190
  %v193 = vsub.f32 %v189, %v191
  %v194 = vadd.f32 %v188, %v190
  %v195 = vadd.f32 %v189, %v191
  %v196 = vmul.f32 %v174, 0.071428575
  %v197 = vmul.f32 %v176, 0.071428575
  %v198 = vmul.f32 %v178, 0.5
  %v199 = vmul.f32 %v180, 0.5
  %v200 = vsub.f32 %v196, %v198
  %v201 = vsub.f32 %v197, %v199
  %v202 = vadd.f32 %v196, %v198
  %v203 = vadd.f32 %v197, %v199
  %v204 = vmul.f32 %v181, 0.071428575
  %v205 = vmul.f32 %v183, 0.071428575
  %v206 = vmul.f32 %v185, 0.5
  %v207 = vmul.f32 %v187, 0.5
  %v208 = vsub.f32 %v204, %v206
  %v209 = vsub.f32 %v205, %v207
  %v210 = vadd.f32 %v204, %v206
  %v211 = vadd.f32 %v205, %v207
  %v212 = vmax.f32 %v192, %v208
  %v213 = vmax.f32 %v193, %v209
  %v214 = vmin.f32 %v194, %v210
  %v215 = vmin.f32 %v195, %v211
  %v216 = vsub.f32 %v214, %v212
  %v217 = vmax.f32 %v216, 0.0
  %v218 = vsub.f32 %v215, %v213
  %v219 = vmax.f32 %v218, 0.0
  %v220 = vmul.f32 %v217, %v219
  %v221 = vsub.f32 %v194, %v192
  %v222 = vsub.f32 %v195, %v193
  %v223 = vmul.f32 %v221, %v222
  %v224 = vsub.f32 %v210, %v208
  %v225 = vsub.f32 %v211, %v209
  %v226 = vmul.f32 %v224, %v225
  %v227 = vadd.f32 %v223, %v226
  %v228 = vsub.f32 %v227, %v220
  %v229 = vadd.f32 %v228, 1e-10
  %v230 = vrcp.pop %v229
  %v231 = vmul.f32 %v229, %v230
  %v232 = vsub.f32 1.0, %v231
  %v233 = vmul.f32 %v230, %v232
  %v234 = vadd.f32 %v230, %v233
  %vm235 = vweird.f32 %v229
  %vm236 = vweird.f32 %v230
  %vm237 = vmor %vm235, %vm236
  %v238 = vsel %vm237, %v230, %v234
  %v239 = vand.u32 2147483647, %v229
  %vm240 = vcmp.eq.f32.partialorder %v239, 8.507059e+37
  %v241 = vand.u32 %v229, 2147483648
  %v242 = vor.u32 1.1754944e-38, %v241
  %v243 = vsel %vm240, %v242, %v238
  %v244 = vmul.f32 %v220, %v243
  %v245 = vmax.f32 %v200, %v208
  %v246 = vmax.f32 %v201, %v209
  %v247 = vmin.f32 %v202, %v210
  %v248 = vmin.f32 %v203, %v211
  %v249 = vsub.f32 %v247, %v245
  %v250 = vmax.f32 %v249, 0.0
  %v251 = vsub.f32 %v248, %v246
  %v252 = vmax.f32 %v251, 0.0
  %v253 = vmul.f32 %v250, %v252
  %v254 = vsub.f32 %v202, %v200
  %v255 = vsub.f32 %v203, %v201
  %v256 = vmul.f32 %v254, %v255
  %v257 = vadd.f32 %v256, %v226
  %v258 = vsub.f32 %v257, %v253
  %v259 = vadd.f32 %v258, 1e-10
  %v260 = vrcp.pop %v259
  %v261 = vmul.f32 %v259, %v260
  %v262 = vsub.f32 1.0, %v261
  %v263 = vmul.f32 %v260, %v262
  %v264 = vadd.f32 %v260, %v263
  %vm265 = vweird.f32 %v259
  %vm266 = vweird.f32 %v260
  %vm267 = vmor %vm265, %vm266
  %v268 = vsel %vm267, %v260, %v264
  %v269 = vand.u32 2147483647, %v259
  %vm270 = vcmp.eq.f32.partialorder %v269, 8.507059e+37
  %v271 = vand.u32 %v259, 2147483648
  %v272 = vor.u32 1.1754944e-38, %v271
  %v273 = vsel %vm270, %v272, %v268
  %v274 = vmul.f32 %v253, %v273
  %vm275 = vcmp.gt.f32.partialorder %v274, %v244
  %v276 = vmax.f32 %v244, %v274
  %v277 = vsel %vm275, %v174, %v166
  %v278 = vsel %vm275, %v176, %v168
  %v279 = vsel %vm275, %v178, %v170
  %v280 = vsel %vm275, %v180, %v172
  %v281 = vsel %vm275, %v19, %v16
  %v282 = vsel %vm275, %v16, %v19
  %s283 = scalar_lea.vmem %s1, 40
  %v284 = vld [vmem:[%s283] sm:$0xff]
  %v285 = vsel %vm275, %v284, %v181
  %s286 = scalar_lea.vmem %s1, 48
  %v287 = vld [vmem:[%s286] sm:$0xff]
  %v288 = vsel %vm275, %v287, %v183
  %s289 = scalar_lea.vmem %s1, 56
  %v290 = vld [vmem:[%s289] sm:$0xff]
  %v291 = vsel %vm275, %v290, %v185
  %s292 = scalar_lea.vmem %s1, 64
  %v293 = vld [vmem:[%s292] sm:$0xff]
  %v294 = vsel %vm275, %v293, %v187
  %v295 = vsub.f32 %v277, %v285
  %v296 = vsub.f32 %v278, %v288
  %v297 = vmax.f32 %v279, 0.0
  %v298 = vrsqrt.pop %v297
  %v299 = vmul.f32 %v298, %v297
  %v300 = vmul.f32 %v299, %v298
  %v301 = vmul.f32 0.5, %v300
  %v302 = vsub.f32 1.5, %v301
  %v303 = vmul.f32 %v298, %v302
  %v304 = vmul.f32 %v297, %v303
  %vm305 = vcmp.eq.f32.partialorder %v297, inf
  %v306 = vsel %vm305, %v297, %v304
  %vm307 = vcmp.eq.f32.partialorder %v297, 0.0
  %v308 = vand.u32 %v297, 2147483648
  %v309 = vsel %vm307, %v308, %v306
  %v310 = vmax.f32 %v291, 0.0
  %v311 = vrsqrt.pop %v310
  %v312 = vmul.f32 %v311, %v310
  %v313 = vmul.f32 %v312, %v311
  %v314 = vmul.f32 0.5, %v313
  %v315 = vsub.f32 1.5, %v314
  %v316 = vmul.f32 %v311, %v315
  %v317 = vmul.f32 %v310, %v316
  %vm318 = vcmp.eq.f32.partialorder %v310, inf
  %v319 = vsel %vm318, %v310, %v317
  %vm320 = vcmp.eq.f32.partialorder %v310, 0.0
  %v321 = vand.u32 %v310, 2147483648
  %v322 = vsel %vm320, %v321, %v319
  %v323 = vsub.f32 %v309, %v322
  %v324 = vmax.f32 %v280, 0.0
  %v325 = vrsqrt.pop %v324
  %v326 = vmul.f32 %v325, %v324
  %v327 = vmul.f32 %v326, %v325
  %v328 = vmul.f32 0.5, %v327
  %v329 = vsub.f32 1.5, %v328
  %v330 = vmul.f32 %v325, %v329
  %v331 = vmul.f32 %v324, %v330
  %vm332 = vcmp.eq.f32.partialorder %v324, inf
  %v333 = vsel %vm332, %v324, %v331
  %vm334 = vcmp.eq.f32.partialorder %v324, 0.0
  %v335 = vand.u32 %v324, 2147483648
  %v336 = vsel %vm334, %v335, %v333
  %v337 = vmax.f32 %v294, 0.0
  %v338 = vrsqrt.pop %v337
  %v339 = vmul.f32 %v338, %v337
  %v340 = vmul.f32 %v339, %v338
  %v341 = vmul.f32 0.5, %v340
  %v342 = vsub.f32 1.5, %v341
  %v343 = vmul.f32 %v338, %v342
  %v344 = vmul.f32 %v337, %v343
  %vm345 = vcmp.eq.f32.partialorder %v337, inf
  %v346 = vsel %vm345, %v337, %v344
  %vm347 = vcmp.eq.f32.partialorder %v337, 0.0
  %v348 = vand.u32 %v337, 2147483648
  %v349 = vsel %vm347, %v348, %v346
  %v350 = vsub.f32 %v336, %v349
  %v351 = vmul.f32 %v295, %v295
  %v352 = vmul.f32 %v296, %v296
  %v353 = vadd.f32 %v351, %v352
  %v354 = vmul.f32 %v323, %v323
  %v355 = vadd.f32 %v353, %v354
  %v356 = vmul.f32 %v350, %v350
  %v357 = vadd.f32 %v355, %v356
  %v358 = vsub.f32 %v281, %v276
  %v359 = vmul.f32 %v358, %v358
  %v360 = vmul.f32 %v282, %v282
  %v361 = vmul.f32 %v357, 5.0
  %v362 = vmul.f32 %v359, 2.0
  %v363 = vadd.f32 %v361, %v362
  %v364 = vadd.f32 %v363, %v360
  %v365 = vadd.f32 %v364, %v165
  %v366 = vmul.f32 %v25, 0.5
  %v367 = vsel %vm14, %v366, 0.0
  %v368 = vsel %vm13, %v365, %v367
  %v369 = vrot.slane %v368, 4
  %v370 = vadd.f32 %v368, %v369
  %v371 = vrot.slane %v370, 2
  %v372 = vadd.f32 %v370, %v371
  %v373 = vrot.slane %v372, 1
  %v374 = vadd.f32 %v372, %v373
  %375 = vst [vmem:[%s2] sm:$0x1] %v374
  // Predicated region
  $region10: #{yolo_loss_pallas.1} parent=0 // pred_check
    _
  $region11: #{yolo_loss_pallas.1} parent=0 // pred_check_branch
    %377 = sbr.rel (0) target = $region13
  $region12: #{yolo_loss_pallas.1} parent=0 // pred_region
    _
  $region13: #{yolo_loss_pallas.1} parent=0 // pred_fallthru
    _
  // Predicated region
  $region14: #{yolo_loss_pallas.1} parent=0 // pred_check
    _
  $region15: #{yolo_loss_pallas.1} parent=0 // pred_check_branch
    %379 = sbr.rel (0) target = $region17
  $region16: #{yolo_loss_pallas.1} parent=0 // pred_region
    _
  $region17: #{yolo_loss_pallas.1} parent=0 // pred_fallthru
    _

</llo_original>
